<compile_context>
chip_gen: v6e
topology: v6e:2x2x1
jax: 0.10.0
libtpu: 0.0.40
codegen_flags: <defaults>
</compile_context>

<pallas_src>
import jax
import jax.numpy as jnp
from jax import lax
from jax.experimental import pallas as pl
from jax.experimental.pallas import tpu as pltpu


# ---------------------------------------------------------------------------
# Fused kernel (B fits in one batch tile): projections + L2 norm + scaled
# cosine similarity, emitting text/image embeds AND both logits matrices.
# logits_per_image is produced with a second tiny MXU dot (ie @ te^T) instead
# of an in-kernel transpose, so no XLU transpose of a possibly non-(8,128)-
# aligned (B, B) tile is required; the MXU is otherwise idle at that point.
# ---------------------------------------------------------------------------
def _fused_kernel(scale_ref, pooled_ref, img_ref, wt_ref, wv_ref,
                  te_ref, ie_ref, lpt_ref, lpi_ref):
    dn_nn = (((1,), (0,)), ((), ()))      # [M,K] x [K,N]
    dn_nt = (((1,), (1,)), ((), ()))      # contract last dims (x @ y^T)

    txt = lax.dot_general(pooled_ref[...].astype(wt_ref.dtype), wt_ref[...],
                          dn_nn, preferred_element_type=jnp.float32)   # (B, P)
    img = lax.dot_general(img_ref[...].astype(wv_ref.dtype), wv_ref[...],
                          dn_nn, preferred_element_type=jnp.float32)   # (B, P)

    # L2 normalize with rsqrt (EUP slot) instead of divide-by-sqrt.
    te = txt * lax.rsqrt(jnp.sum(txt * txt, axis=-1, keepdims=True))
    ie = img * lax.rsqrt(jnp.sum(img * img, axis=-1, keepdims=True))
    te_ref[...] = te
    ie_ref[...] = ie

    scale = scale_ref[0, 0]
    lpt_ref[...] = lax.dot_general(te, ie, dn_nt,
                                   preferred_element_type=jnp.float32) * scale
    lpi_ref[...] = lax.dot_general(ie, te, dn_nt,
                                   preferred_element_type=jnp.float32) * scale


# ---------------------------------------------------------------------------
# Two-stage path for large B.
# Kernel 1: batch-tiled projections + L2 norm (weights VMEM-resident).
# ---------------------------------------------------------------------------
def _project_kernel(pooled_ref, img_ref, wt_ref, wv_ref, te_ref, ie_ref):
    dn_nn = (((1,), (0,)), ((), ()))
    txt = lax.dot_general(pooled_ref[...].astype(wt_ref.dtype), wt_ref[...],
                          dn_nn, preferred_element_type=jnp.float32)
    img = lax.dot_general(img_ref[...].astype(wv_ref.dtype), wv_ref[...],
                          dn_nn, preferred_element_type=jnp.float32)
    te_ref[...] = txt * lax.rsqrt(jnp.sum(txt * txt, axis=-1, keepdims=True))
    ie_ref[...] = img * lax.rsqrt(jnp.sum(img * img, axis=-1, keepdims=True))


# Kernel 2: tiled scaled similarity; emits lpt tile and its transpose (lpi)
# through a (j, i) out_spec so no separate XLA transpose pass is needed.
def _logits_kernel(scale_ref, te_ref, ie_ref, lpt_ref, lpi_ref):
    dn_nt = (((1,), (1,)), ((), ()))
    sim = lax.dot_general(te_ref[...], ie_ref[...], dn_nt,
                          preferred_element_type=jnp.float32)
    lpt = sim * scale_ref[0, 0]
    lpt_ref[...] = lpt
    lpi_ref[...] = jnp.transpose(lpt)     # aligned (tile, tile) block; XLU slot


def _fused_call(scale, pooled, image_pooled, wt, wv):
    B, Dt = pooled.shape
    Dv = image_pooled.shape[-1]
    P = wt.shape[-1]
    return pl.pallas_call(
        _fused_kernel,
        out_shape=(
            jax.ShapeDtypeStruct((B, P), jnp.float32),   # text_embeds
            jax.ShapeDtypeStruct((B, P), jnp.float32),   # image_embeds
            jax.ShapeDtypeStruct((B, B), jnp.float32),   # logits_per_text
            jax.ShapeDtypeStruct((B, B), jnp.float32),   # logits_per_image
        ),
        grid=(1,),
        in_specs=[
            pl.BlockSpec(memory_space=pltpu.MemorySpace.SMEM),   # exp(scale)
            pl.BlockSpec((B, Dt), lambda i: (0, 0)),
            pl.BlockSpec((B, Dv), lambda i: (0, 0)),
            pl.BlockSpec((Dt, P), lambda i: (0, 0)),
            pl.BlockSpec((Dv, P), lambda i: (0, 0)),
        ],
        out_specs=(
            pl.BlockSpec((B, P), lambda i: (0, 0)),
            pl.BlockSpec((B, P), lambda i: (0, 0)),
            pl.BlockSpec((B, B), lambda i: (0, 0)),
            pl.BlockSpec((B, B), lambda i: (0, 0)),
        ),
    )(scale, pooled, image_pooled, wt, wv)


def _two_stage_call(scale, pooled, image_pooled, wt, wv, tile):
    B, Dt = pooled.shape
    Dv = image_pooled.shape[-1]
    P = wt.shape[-1]

    # Pad batch to a tile multiple so every block is dense/aligned.  Padded
    # rows produce NaN embeds (0/0 norm) but only feed output rows/cols that
    # are sliced off below; the contraction dim P is always fully valid.
    Bp = pl.cdiv(B, tile) * tile
    pooled_p = jnp.pad(pooled, ((0, Bp - B), (0, 0)))
    img_p = jnp.pad(image_pooled, ((0, Bp - B), (0, 0)))
    nb = Bp // tile

    te_p, ie_p = pl.pallas_call(
        _project_kernel,
        out_shape=(jax.ShapeDtypeStruct((Bp, P), jnp.float32),
                   jax.ShapeDtypeStruct((Bp, P), jnp.float32)),
        grid=(nb,),
        in_specs=[
            pl.BlockSpec((tile, Dt), lambda i: (i, 0)),
            pl.BlockSpec((tile, Dv), lambda i: (i, 0)),
            # Constant index_map -> weights DMA'd once, VMEM-resident.
            pl.BlockSpec((Dt, P), lambda i: (0, 0)),
            pl.BlockSpec((Dv, P), lambda i: (0, 0)),
        ],
        out_specs=(pl.BlockSpec((tile, P), lambda i: (i, 0)),
                   pl.BlockSpec((tile, P), lambda i: (i, 0))),
        compiler_params=pltpu.CompilerParams(
            dimension_semantics=("parallel",)),
    )(pooled_p, img_p, wt, wv)

    lpt_p, lpi_p = pl.pallas_call(
        _logits_kernel,
        out_shape=(jax.ShapeDtypeStruct((Bp, Bp), jnp.float32),
                   jax.ShapeDtypeStruct((Bp, Bp), jnp.float32)),
        grid=(nb, nb),
        in_specs=[
            pl.BlockSpec(memory_space=pltpu.MemorySpace.SMEM),
            pl.BlockSpec((tile, P), lambda i, j: (i, 0)),
            pl.BlockSpec((tile, P), lambda i, j: (j, 0)),
        ],
        out_specs=(pl.BlockSpec((tile, tile), lambda i, j: (i, j)),
                   pl.BlockSpec((tile, tile), lambda i, j: (j, i))),
        compiler_params=pltpu.CompilerParams(
            dimension_semantics=("parallel", "parallel")),
    )(scale, te_p, ie_p)

    return te_p[:B], ie_p[:B], lpt_p[:B, :B], lpi_p[:B, :B]


def clip_post_processing(input_ids, vision_outputs, last_hidden_state,
                         *encoder_outputs, visual_proj_w, text_proj_w,
                         logit_scale, matmul_dtype=jnp.bfloat16,
                         batch_tile=256, fuse_max_batch=256):
    """Mirrors CLIPPostProcessingWrapper.forward.

    visual_proj_w: (P, Dv)  torch Linear weight layout (out, in)
    text_proj_w:   (P, Dt)
    logit_scale:   scalar (pre-exp, as the torch parameter)
    """
    B = last_hidden_state.shape[0]
    image_pooled = vision_outputs[1]                            # (B, Dv)

    # EOS pooling — same argmax convention as the torch module.  Done as cheap
    # XLA glue so the kernel can run dense batched matmuls; pooled is also a
    # module output (text_outputs[1]).
    eos_idx = jnp.argmax(jnp.asarray(input_ids, jnp.int32), axis=-1)
    pooled = last_hidden_state[jnp.arange(B), eos_idx]          # (B, Dt)

    # One-time transpose to (K, N) layout so the MXU sees [M,K] x [K,N]
    # directly (no per-step XLU transpose of the resident weight tiles).
    wt = jnp.asarray(text_proj_w).T.astype(matmul_dtype)        # (Dt, P)
    wv = jnp.asarray(visual_proj_w).T.astype(matmul_dtype)      # (Dv, P)

    # exp(logit_scale) once; read from SMEM inside the kernel.
    scale = jnp.exp(jnp.asarray(logit_scale, jnp.float32)).reshape(1, 1)

    if B <= fuse_max_batch:
        te, ie, lpt, lpi = _fused_call(scale, pooled, image_pooled, wt, wv)
    else:
        te, ie, lpt, lpi = _two_stage_call(scale, pooled, image_pooled,
                                           wt, wv, batch_tile)

    # Assemble the passthrough tuple exactly like the torch module.
    text_outputs = (last_hidden_state, pooled) + tuple(encoder_outputs[1:])
    return (lpi, lpt, te, ie) + text_outputs + tuple(vision_outputs)


def _reference(input_ids, image_pooled, last_hidden_state, visual_proj_w,
               text_proj_w, logit_scale, matmul_dtype):
    """Pure-JAX reference with the same bf16 MXU casts as the kernel."""
    B = last_hidden_state.shape[0]
    idx = jnp.argmax(input_ids.astype(jnp.int32), axis=-1)
    pooled = last_hidden_state[jnp.arange(B), idx]
    txt = jnp.dot(pooled.astype(matmul_dtype),
                  text_proj_w.astype(matmul_dtype).T,
                  preferred_element_type=jnp.float32)
    img = jnp.dot(image_pooled.astype(matmul_dtype),
                  visual_proj_w.astype(matmul_dtype).T,
                  preferred_element_type=jnp.float32)
    txt = txt * lax.rsqrt(jnp.sum(txt * txt, axis=-1, keepdims=True))
    img = img * lax.rsqrt(jnp.sum(img * img, axis=-1, keepdims=True))
    lpt = jnp.dot(txt, img.T, preferred_element_type=jnp.float32) * jnp.exp(logit_scale)
    return lpt.T, lpt, txt, img, pooled


if __name__ == "__main__":
    B, S, Dt, Dv, P, Sv = 2, 8, 32, 48, 32, 10

    key = jax.random.PRNGKey(0)
    k = jax.random.split(key, 8)

    input_ids = jax.random.randint(k[0], (B, S), 0, 1000, dtype=jnp.int32)
    last_hidden_state = jax.random.normal(k[1], (B, S, Dt), jnp.float32)
    vision_last_hidden = jax.random.normal(k[2], (B, Sv, Dv), jnp.float32)
    vision_pooled = jax.random.normal(k[3], (B, Dv), jnp.float32)
    vision_outputs = (vision_last_hidden, vision_pooled)
    # two dummy encoder outputs so encoder_outputs[1:] slicing is exercised
    encoder_outputs = (jax.random.normal(k[4], (B, S, Dt), jnp.float32),
                       jax.random.normal(k[5], (B, S, Dt), jnp.float32))

    # deterministic synthetic CLIP parameters (torch Linear layout: (out, in))
    visual_proj_w = 0.05 * jax.random.normal(k[6], (P, Dv), jnp.float32)
    text_proj_w = 0.05 * jax.random.normal(k[7], (P, Dt), jnp.float32)
    logit_scale = jnp.log(1.0 / 0.07).astype(jnp.float32)      # CLIP init value

    out = clip_post_processing(
        input_ids, vision_outputs, last_hidden_state, *encoder_outputs,
        visual_proj_w=visual_proj_w, text_proj_w=text_proj_w,
        logit_scale=logit_scale)
    out = jax.block_until_ready(out)

    lpi, lpt, te, ie = out[0], out[1], out[2], out[3]
    pooled = out[5]

    r_lpi, r_lpt, r_te, r_ie, r_pooled = _reference(
        input_ids, vision_pooled, last_hidden_state,
        visual_proj_w, text_proj_w, logit_scale, jnp.bfloat16)

    assert jnp.allclose(pooled, r_pooled, atol=1e-6, rtol=1e-6)
    assert jnp.allclose(te, r_te, atol=1e-4, rtol=1e-4)
    assert jnp.allclose(ie, r_ie, atol=1e-4, rtol=1e-4)
    assert jnp.allclose(lpt, r_lpt, atol=1e-3, rtol=1e-3)
    assert jnp.allclose(lpi, r_lpi, atol=1e-3, rtol=1e-3)
    assert len(out) == 4 + 2 + len(encoder_outputs[1:]) + len(vision_outputs)

    print("KERNEL_OK")
</pallas_src>

<mosaic_0001>
module attributes {stable_mosaic.version = 11 : i64} {
  func.func @_fused_kernel(%arg0: i32, %arg1: memref<1x1xf32, #tpu.memory_space<smem>>, %arg2: memref<2x32xf32, #tpu.memory_space<vmem>>, %arg3: memref<2x48xf32, #tpu.memory_space<vmem>>, %arg4: memref<32x32xbf16, #tpu.memory_space<vmem>>, %arg5: memref<48x32xbf16, #tpu.memory_space<vmem>>, %arg6: memref<2x32xf32, #tpu.memory_space<vmem>>, %arg7: memref<2x32xf32, #tpu.memory_space<vmem>>, %arg8: memref<2x2xf32, #tpu.memory_space<vmem>>, %arg9: memref<2x2xf32, #tpu.memory_space<vmem>>) attributes {dimension_semantics = [#tpu.dimension_semantics<arbitrary>], iteration_bounds = array<i64: 1>, scalar_prefetch = 0 : i64, scratch_operands = 0 : i64, tpu.core_type = #tpu.core_type<tc>, window_params = [{transform_indices = @transform_0, window_bounds = array<i64: 1, 1>}, {pipeline_mode = #tpu.pipeline_mode<synchronous>, transform_indices = @transform_1, window_bounds = array<i64: 2, 32>}, {pipeline_mode = #tpu.pipeline_mode<synchronous>, transform_indices = @transform_2, window_bounds = array<i64: 2, 48>}, {pipeline_mode = #tpu.pipeline_mode<synchronous>, transform_indices = @transform_3, window_bounds = array<i64: 32, 32>}, {pipeline_mode = #tpu.pipeline_mode<synchronous>, transform_indices = @transform_4, window_bounds = array<i64: 48, 32>}, {pipeline_mode = #tpu.pipeline_mode<synchronous>, transform_indices = @transform_5, window_bounds = array<i64: 2, 32>}, {pipeline_mode = #tpu.pipeline_mode<synchronous>, transform_indices = @transform_6, window_bounds = array<i64: 2, 32>}, {pipeline_mode = #tpu.pipeline_mode<synchronous>, transform_indices = @transform_7, window_bounds = array<i64: 2, 2>}, {pipeline_mode = #tpu.pipeline_mode<synchronous>, transform_indices = @transform_8, window_bounds = array<i64: 2, 2>}]} {
    %c0 = arith.constant 0 : index
    %c0_0 = arith.constant 0 : index
    %0 = vector.load %arg2[%c0, %c0_0] : memref<2x32xf32, #tpu.memory_space<vmem>>, vector<2x32xf32>
    %1 = arith.truncf %0 : vector<2x32xf32> to vector<2x32xbf16>
    %c0_1 = arith.constant 0 : index
    %c0_2 = arith.constant 0 : index
    %2 = vector.load %arg4[%c0_1, %c0_2] : memref<32x32xbf16, #tpu.memory_space<vmem>>, vector<32x32xbf16>
    %cst = arith.constant dense<0.000000e+00> : vector<2x32xf32>
    %3 = tpu.matmul %1, %2, %cst {dimension_numbers = #tpu.dot_dimension_numbers<[1], [0], [0], [1], [0, 0, 1, 1], [], []>} : vector<2x32xbf16>, vector<32x32xbf16>, vector<2x32xf32> -> vector<2x32xf32>
    %c0_3 = arith.constant 0 : index
    %c0_4 = arith.constant 0 : index
    %4 = vector.load %arg3[%c0_3, %c0_4] : memref<2x48xf32, #tpu.memory_space<vmem>>, vector<2x48xf32>
    %5 = arith.truncf %4 : vector<2x48xf32> to vector<2x48xbf16>
    %c0_5 = arith.constant 0 : index
    %c0_6 = arith.constant 0 : index
    %6 = vector.load %arg5[%c0_5, %c0_6] : memref<48x32xbf16, #tpu.memory_space<vmem>>, vector<48x32xbf16>
    %cst_7 = arith.constant dense<0.000000e+00> : vector<2x32xf32>
    %7 = tpu.matmul %5, %6, %cst_7 {dimension_numbers = #tpu.dot_dimension_numbers<[1], [0], [0], [1], [0, 0, 1, 1], [], []>} : vector<2x48xbf16>, vector<48x32xbf16>, vector<2x32xf32> -> vector<2x32xf32>
    %8 = arith.mulf %3, %3 : vector<2x32xf32>
    %cst_8 = arith.constant dense<0.000000e+00> : vector<2xf32>
    %9 = vector.multi_reduction <add>, %8, %cst_8 [1] : vector<2x32xf32> to vector<2xf32>
    %10 = vector.shape_cast %9 : vector<2xf32> to vector<2x1xf32>
    %11 = math.rsqrt %10 : vector<2x1xf32>
    %12 = vector.broadcast %11 : vector<2x1xf32> to vector<2x32xf32>
    %13 = arith.mulf %3, %12 : vector<2x32xf32>
    %14 = arith.mulf %7, %7 : vector<2x32xf32>
    %cst_9 = arith.constant dense<0.000000e+00> : vector<2xf32>
    %15 = vector.multi_reduction <add>, %14, %cst_9 [1] : vector<2x32xf32> to vector<2xf32>
    %16 = vector.shape_cast %15 : vector<2xf32> to vector<2x1xf32>
    %17 = math.rsqrt %16 : vector<2x1xf32>
    %18 = vector.broadcast %17 : vector<2x1xf32> to vector<2x32xf32>
    %19 = arith.mulf %7, %18 : vector<2x32xf32>
    %c0_10 = arith.constant 0 : index
    %c0_11 = arith.constant 0 : index
    %20 = vector.load %arg6[%c0_10, %c0_11] : memref<2x32xf32, #tpu.memory_space<vmem>>, vector<2x32xf32>
    tpu.vector_store %arg6[%c0_10, %c0_11], %13 {strides = array<i32>} : memref<2x32xf32, #tpu.memory_space<vmem>>, vector<2x32xf32>,
    %c0_12 = arith.constant 0 : index
    %c0_13 = arith.constant 0 : index
    %21 = vector.load %arg7[%c0_12, %c0_13] : memref<2x32xf32, #tpu.memory_space<vmem>>, vector<2x32xf32>
    tpu.vector_store %arg7[%c0_12, %c0_13], %19 {strides = array<i32>} : memref<2x32xf32, #tpu.memory_space<vmem>>, vector<2x32xf32>,
    %c0_14 = arith.constant 0 : index
    %c0_15 = arith.constant 0 : index
    %22 = memref.load %arg1[%c0_14, %c0_15] : memref<1x1xf32, #tpu.memory_space<smem>>
    %cst_16 = arith.constant dense<0.000000e+00> : vector<2x2xf32>
    %23 = tpu.matmul %13, %19, %cst_16 {dimension_numbers = #tpu.dot_dimension_numbers<[1], [1], [0], [0], [0, 0, 1, 0], [], []>} : vector<2x32xf32>, vector<2x32xf32>, vector<2x2xf32> -> vector<2x2xf32>
    %24 = vector.broadcast %22 : f32 to vector<2x2xf32>
    %25 = arith.mulf %23, %24 : vector<2x2xf32>
    %c0_17 = arith.constant 0 : index
    %c0_18 = arith.constant 0 : index
    %26 = vector.load %arg8[%c0_17, %c0_18] : memref<2x2xf32, #tpu.memory_space<vmem>>, vector<2x2xf32>
    tpu.vector_store %arg8[%c0_17, %c0_18], %25 {strides = array<i32>} : memref<2x2xf32, #tpu.memory_space<vmem>>, vector<2x2xf32>,
    %cst_19 = arith.constant dense<0.000000e+00> : vector<2x2xf32>
    %27 = tpu.matmul %19, %13, %cst_19 {dimension_numbers = #tpu.dot_dimension_numbers<[1], [1], [0], [0], [0, 0, 1, 0], [], []>} : vector<2x32xf32>, vector<2x32xf32>, vector<2x2xf32> -> vector<2x2xf32>
    %28 = vector.broadcast %22 : f32 to vector<2x2xf32>
    %29 = arith.mulf %27, %28 : vector<2x2xf32>
    %c0_20 = arith.constant 0 : index
    %c0_21 = arith.constant 0 : index
    %30 = vector.load %arg9[%c0_20, %c0_21] : memref<2x2xf32, #tpu.memory_space<vmem>>, vector<2x2xf32>
    tpu.vector_store %arg9[%c0_20, %c0_21], %29 {strides = array<i32>} : memref<2x2xf32, #tpu.memory_space<vmem>>, vector<2x2xf32>,
    return
  }
  func.func @transform_0(%arg0: i32) -> (i32, i32) {
    %c0_i32 = arith.constant 0 : i32
    %c0_i32_0 = arith.constant 0 : i32
    %c0_i32_1 = arith.constant 0 : i32
    return %c0_i32, %c0_i32_0 : i32, i32
  }
  func.func @transform_1(%arg0: i32) -> (i32, i32) {
    %c0_i32 = arith.constant 0 : i32
    %c0_i32_0 = arith.constant 0 : i32
    %c0_i32_1 = arith.constant 0 : i32
    return %c0_i32, %c0_i32_0 : i32, i32
  }
  func.func @transform_2(%arg0: i32) -> (i32, i32) {
    %c0_i32 = arith.constant 0 : i32
    %c0_i32_0 = arith.constant 0 : i32
    %c0_i32_1 = arith.constant 0 : i32
    return %c0_i32, %c0_i32_0 : i32, i32
  }
  func.func @transform_3(%arg0: i32) -> (i32, i32) {
    %c0_i32 = arith.constant 0 : i32
    %c0_i32_0 = arith.constant 0 : i32
    %c0_i32_1 = arith.constant 0 : i32
    return %c0_i32, %c0_i32_0 : i32, i32
  }
  func.func @transform_4(%arg0: i32) -> (i32, i32) {
    %c0_i32 = arith.constant 0 : i32
    %c0_i32_0 = arith.constant 0 : i32
    %c0_i32_1 = arith.constant 0 : i32
    return %c0_i32, %c0_i32_0 : i32, i32
  }
  func.func @transform_5(%arg0: i32) -> (i32, i32) {
    %c0_i32 = arith.constant 0 : i32
    %c0_i32_0 = arith.constant 0 : i32
    %c0_i32_1 = arith.constant 0 : i32
    return %c0_i32, %c0_i32_0 : i32, i32
  }
  func.func @transform_6(%arg0: i32) -> (i32, i32) {
    %c0_i32 = arith.constant 0 : i32
    %c0_i32_0 = arith.constant 0 : i32
    %c0_i32_1 = arith.constant 0 : i32
    return %c0_i32, %c0_i32_0 : i32, i32
  }
  func.func @transform_7(%arg0: i32) -> (i32, i32) {
    %c0_i32 = arith.constant 0 : i32
    %c0_i32_0 = arith.constant 0 : i32
    %c0_i32_1 = arith.constant 0 : i32
    return %c0_i32, %c0_i32_0 : i32, i32
  }
  func.func @transform_8(%arg0: i32) -> (i32, i32) {
    %c0_i32 = arith.constant 0 : i32
    %c0_i32_0 = arith.constant 0 : i32
    %c0_i32_1 = arith.constant 0 : i32
    return %c0_i32, %c0_i32_0 : i32, i32
  }
}

</mosaic_0001>

<llo_original>
// kernel: tpu_custom_call.1
$region0: #{tpu_custom_call.1}
  #allocation0 [shape = 'u32[]', space=smem, size = 0x4, offset = 0x4, fixed_abs, tag = 'smem constant byte address 0x4 - core index']
  #allocation1 [shape = 'u32[144,128]{1,0:T(1,128)}', space=vmem, size = 0x12000, scoped, tag = 'internal scratch']
  #allocation2 [shape = 'f32[1,1]{1,0:T(1,128)S(6)}', space=smem, size = 0x200, scoped, tag = 'scoped memory for tpu_custom_call.1']
  %s0 = inlined_call_operand.<no memory space> [shape: f32[1,1], index: 0, kind: input, shape index: {}]
  %s1 = inlined_call_operand.vmem [shape: f32[2,32], index: 1, kind: input, shape index: {}]
  %s2 = inlined_call_operand.vmem [shape: f32[2,48], index: 2, kind: input, shape index: {}]
  %s3 = inlined_call_operand.vmem [shape: bf16[32,32], index: 3, kind: input, shape index: {}]
  %s4 = inlined_call_operand.vmem [shape: bf16[48,32], index: 4, kind: input, shape index: {}]
  %s5 = inlined_call_operand.hbm [shape: f32[2,32], index: 5, kind: output, shape index: {0}]
  %s6 = inlined_call_operand.hbm [shape: f32[2,32], index: 6, kind: output, shape index: {1}]
  %s7 = inlined_call_operand.hbm [shape: f32[2,2], index: 7, kind: output, shape index: {2}]
  %s8 = inlined_call_operand.hbm [shape: f32[2,2], index: 8, kind: output, shape index: {3}]
  %9 = xla_tuple %s5, %s6, %s7, %s8
  %s10 = sld [smem:[#allocation0]]
  $region54: #{tpu_custom_call.1} parent=0
    _
  %s12 = ssub.s32 1, %s10
  %s13 = scalar_select 0, %s12, %s10
  %14 = sst [smem:[#allocation2]] %s0
  $region1: #{tpu_custom_call.1} parent=0
    #allocation3 [shape = 'u8[1024]{0}', space=vmem, size = 0x400, scoped, tag = 'output window, operand 0, single buffered']
    #allocation4 [shape = 's32[1]{0}', space=sflag, size = 0x4, scoped, tag = 'scoped memory for tpu_custom_call.1']
    #allocation5 [shape = 'u8[1024]{0}', space=vmem, size = 0x400, scoped, tag = 'output window, operand 1, single buffered']
    #allocation6 [shape = 's32[1]{0}', space=sflag, size = 0x4, scoped, tag = 'scoped memory for tpu_custom_call.1']
    #allocation7 [shape = 'u8[1024]{0}', space=vmem, size = 0x400, scoped, tag = 'output window, operand 2, single buffered']
    #allocation8 [shape = 'u8[1024]{0}', space=vmem, size = 0x400, scoped, tag = 'output window, operand 3, single buffered']
    #allocation9 [shape = 's32[1]{0}', space=sflag, size = 0x4, scoped, tag = 'scoped memory for tpu_custom_call.1']
    %15 = vsyncpa [#allocation4], 0
    %16 = vsyncpa [#allocation6], 0
    %17 = vsyncpa [#allocation9], 0
    // Predicated region
    $region2: #{tpu_custom_call.1} parent=1 // pred_check
      _
    $region3: #{tpu_custom_call.1} parent=1 // pred_check_branch
      %19 = sbr.rel (0) target = $region5
    $region4: #{tpu_custom_call.1} parent=1 // pred_region
      _
    $region5: #{tpu_custom_call.1} parent=1 // pred_fallthru
      _
    // Predicated region
    $region6: #{tpu_custom_call.1} parent=1 // pred_check
      _
    $region7: #{tpu_custom_call.1} parent=1 // pred_check_branch
      %21 = sbr.rel (0) target = $region9
    $region8: #{tpu_custom_call.1} parent=1 // pred_region
      _
    $region9: #{tpu_custom_call.1} parent=1 // pred_fallthru
      _
    // Predicated region
    $region10: #{tpu_custom_call.1} parent=1 // pred_check
      _
    $region11: #{tpu_custom_call.1} parent=1 // pred_check_branch
      %23 = sbr.rel (0) target = $region13
    $region12: #{tpu_custom_call.1} parent=1 // pred_region
      _
    $region13: #{tpu_custom_call.1} parent=1 // pred_fallthru
      _
    // Predicated region
    $region14: #{tpu_custom_call.1} parent=1 // pred_check
      _
    $region15: #{tpu_custom_call.1} parent=1 // pred_check_branch
      %25 = sbr.rel (0) target = $region17
    $region16: #{tpu_custom_call.1} parent=1 // pred_region
      _
    $region17: #{tpu_custom_call.1} parent=1 // pred_fallthru
      _
    // Predicated region
    $region18: #{tpu_custom_call.1} parent=1 // pred_check
      _
    $region19: #{tpu_custom_call.1} parent=1 // pred_check_branch
      %27 = sbr.rel (0) target = $region21
    $region20: #{tpu_custom_call.1} parent=1 // pred_region
      _
    $region21: #{tpu_custom_call.1} parent=1 // pred_fallthru
      _
    %v29 = vld [vmem:[%s1] sm:$0x3]
    %v30 = vpack.c.bf16 %v29, %v29
    %v31 = vld [vmem:[%s3] sm:$0xf]
    %v32 = vld [vmem:[%s3 + $0x4] sm:$0xf]
    %v33 = vld [vmem:[%s3 + $0x8] sm:$0xf]
    %v34 = vld [vmem:[%s3 + $0xc] sm:$0xf]
    %v39 = vunpack.c.l.b16 %v31
    %v40 = vunpack.c.l.b16 %v32
    %v41 = vunpack.c.l.b16 %v33
    %v42 = vunpack.c.l.b16 %v34
    %v43 = vpack.c.b16 %v40, %v39
    %v44 = vpack.c.b16 %v42, %v41
    %vm47 = vcmask 261120
    %v49 = vsel %vm47, %v30, 0
    %51 = vmatprep.subr.bf16.mxu0 0
    %52 = vmatpush1.bf16.msra.mxu0 0
    %53 = vmatprep.subr.bf16.mxu0 0
    %54 = vmatpush1.bf16.msra.mxu0 0
    %55 = vmatprep.subr.bf16.mxu0 0
    %56 = vmatpush1.bf16.msra.mxu0 0
    %57 = vmatprep.subr.bf16.mxu0 0
    %58 = vmatpush1.bf16.msra.mxu0 0
    %59 = vmatprep.subr.bf16.mxu0 0
    %60 = vmatpush1.bf16.msra.mxu0 0
    %61 = vmatprep.subr.bf16.mxu0 0
    %62 = vmatpush1.bf16.msra.mxu0 0
    %63 = vmatprep.subr.bf16.mxu0 0
    %64 = vmatpush1.bf16.msra.mxu0 %v44
    %65 = vmatprep.subr.bf16.mxu0 0
    %66 = vmatpush1.bf16.msra.mxu0 %v43
    %67 = vmatprep.subr.bf16.mxu0 0
    %68 = vmatpush2.bf16.msra.mxu0 0
    %69 = vmatprep.subr.bf16.mxu0 0
    %70 = vmatpush2.bf16.msra.mxu0 0
    %71 = vmatprep.subr.bf16.mxu0 0
    %72 = vmatpush2.bf16.msra.mxu0 0
    %73 = vmatprep.subr.bf16.mxu0 0
    %74 = vmatpush2.bf16.msra.mxu0 0
    %75 = vmatprep.subr.bf16.mxu0 0
    %76 = vmatpush2.bf16.msra.mxu0 0
    %77 = vmatprep.subr.bf16.mxu0 0
    %78 = vmatpush2.bf16.msra.mxu0 0
    %79 = vmatprep.subr.bf16.mxu0 0
    %80 = vmatpush2.bf16.msra.mxu0 0
    %81 = vmatprep.subr.bf16.mxu0 0
    %82 = vmatpush2.bf16.msra.mxu0 0
    %83 = vmatprep.mubr.bf16.mxu0 0
    %84 = vmatmul.mubr.bf16.gmra.mxu0 %v49
    %v85 = vpop.f32.mrf.mxu0
    %v86 = vadd.f32 0.0, %v85
    %v87 = vpop.f32.mrf.mxu0
    %v88 = vpop.f32.mrf.mxu0
    %v89 = vpop.f32.mrf.mxu0
    %90 = vdwg.mxu0
    %v91 = vld [vmem:[%s2] sm:$0x3]
    %v92 = vpack.c.bf16 %v91, %v91
    %v93 = vld [vmem:[%s4] sm:$0xf]
    %v94 = vld [vmem:[%s4 + $0x4] sm:$0xf]
    %v95 = vld [vmem:[%s4 + $0x8] sm:$0xf]
    %v96 = vld [vmem:[%s4 + $0xc] sm:$0xf]
    %v97 = vld [vmem:[%s4 + $0x10] sm:$0xf]
    %v98 = vld [vmem:[%s4 + $0x14] sm:$0xf]
    %v105 = vunpack.c.l.b16 %v93
    %v106 = vunpack.c.l.b16 %v94
    %v107 = vunpack.c.l.b16 %v95
    %v108 = vunpack.c.l.b16 %v96
    %v109 = vunpack.c.l.b16 %v97
    %v110 = vunpack.c.l.b16 %v98
    %v111 = vpack.c.b16 %v106, %v105
    %v112 = vpack.c.b16 %v108, %v107
    %v113 = vpack.c.b16 %v110, %v109
    %vm117 = vcmask 392192
    %v119 = vsel %vm117, %v92, 0
    %121 = vmatprep.subr.bf16.mxu0 0
    %122 = vmatpush1.bf16.msra.mxu0 0
    %123 = vmatprep.subr.bf16.mxu0 0
    %124 = vmatpush1.bf16.msra.mxu0 0
    %125 = vmatprep.subr.bf16.mxu0 0
    %126 = vmatpush1.bf16.msra.mxu0 0
    %127 = vmatprep.subr.bf16.mxu0 0
    %128 = vmatpush1.bf16.msra.mxu0 0
    %129 = vmatprep.subr.bf16.mxu0 0
    %130 = vmatpush1.bf16.msra.mxu0 0
    %131 = vmatprep.subr.bf16.mxu0 0
    %132 = vmatpush1.bf16.msra.mxu0 %v113
    %133 = vmatprep.subr.bf16.mxu0 0
    %134 = vmatpush1.bf16.msra.mxu0 %v112
    %135 = vmatprep.subr.bf16.mxu0 0
    %136 = vmatpush1.bf16.msra.mxu0 %v111
    %137 = vmatprep.subr.bf16.mxu0 0
    %138 = vmatpush2.bf16.msra.mxu0 0
    %139 = vmatprep.subr.bf16.mxu0 0
    %140 = vmatpush2.bf16.msra.mxu0 0
    %141 = vmatprep.subr.bf16.mxu0 0
    %142 = vmatpush2.bf16.msra.mxu0 0
    %143 = vmatprep.subr.bf16.mxu0 0
    %144 = vmatpush2.bf16.msra.mxu0 0
    %145 = vmatprep.subr.bf16.mxu0 0
    %146 = vmatpush2.bf16.msra.mxu0 0
    %147 = vmatprep.subr.bf16.mxu0 0
    %148 = vmatpush2.bf16.msra.mxu0 0
    %149 = vmatprep.subr.bf16.mxu0 0
    %150 = vmatpush2.bf16.msra.mxu0 0
    %151 = vmatprep.subr.bf16.mxu0 0
    %152 = vmatpush2.bf16.msra.mxu0 0
    %153 = vmatprep.mubr.bf16.mxu0 0
    %154 = vmatmul.mubr.bf16.gmra.mxu0 %v119
    %v155 = vpop.f32.mrf.mxu0
    %v156 = vadd.f32 0.0, %v155
    %v157 = vpop.f32.mrf.mxu0
    %v158 = vpop.f32.mrf.mxu0
    %v159 = vpop.f32.mrf.mxu0
    %160 = vdwg.mxu0
    %v161 = vmul.f32 %v86, %v86
    %vm162 = vcmask 254976
    %v163 = vsel %vm162, %v161, 0.0
    %164 = vadd.xlane.f32.xlu0 %v163
    %v165 = vpop.xlane.xlu0 %164
    %v166 = vrsqrt.pop %v165
    %v167 = vmul.f32 %v86, %v166
    %v168 = vmul.f32 %v156, %v156
    %v169 = vsel %vm162, %v168, 0.0
    %170 = vadd.xlane.f32.xlu0 %v169
    %v171 = vpop.xlane.xlu0 %170
    %v172 = vrsqrt.pop %v171
    %v173 = vmul.f32 %v156, %v172
    %174 = vst.msk [vmem:[#allocation3] sm:$0x3] %vm162, %v167
    %175 = vst.msk [vmem:[#allocation5] sm:$0x3] %vm162, %v173
    %s176 = sld [smem:[#allocation2]]
    %v178 = vsel %vm47, %v167, 0
    %v181 = vsel %vm47, %v173, 0
    %183 = vmatprep.subr.mxu0 0.0
    %184 = vmatpush1.xpose.msra.mxu0 0.0
    %185 = vmatprep.subr.mxu0 0.0
    %186 = vmatpush1.xpose.msra.mxu0 0.0
    %187 = vmatprep.subr.mxu0 0.0
    %188 = vmatpush1.xpose.msra.mxu0 0.0
    %189 = vmatprep.subr.mxu0 0.0
    %190 = vmatpush1.xpose.msra.mxu0 0.0
    %191 = vmatprep.subr.mxu0 0.0
    %192 = vmatpush1.xpose.msra.mxu0 0.0
    %193 = vmatprep.subr.mxu0 0.0
    %194 = vmatpush1.xpose.msra.mxu0 0.0
    %195 = vmatprep.subr.mxu0 0.0
    %196 = vmatpush1.xpose.msra.mxu0 0.0
    %197 = vmatprep.subr.mxu0 0.0
    %198 = vmatpush1.xpose.msra.mxu0 0.0
    %199 = vmatprep.subr.mxu0 0.0
    %200 = vmatpush1.xpose.msra.mxu0 0.0
    %201 = vmatprep.subr.mxu0 0.0
    %202 = vmatpush1.xpose.msra.mxu0 0.0
    %203 = vmatprep.subr.mxu0 0.0
    %204 = vmatpush1.xpose.msra.mxu0 0.0
    %205 = vmatprep.subr.mxu0 0.0
    %206 = vmatpush1.xpose.msra.mxu0 0.0
    %207 = vmatprep.subr.mxu0 0.0
    %208 = vmatpush1.xpose.msra.mxu0 0.0
    %209 = vmatprep.subr.mxu0 0.0
    %210 = vmatpush1.xpose.msra.mxu0 0.0
    %211 = vmatprep.subr.mxu0 0.0
    %212 = vmatpush1.xpose.msra.mxu0 0.0
    %213 = vmatprep.subr.mxu0 0.0
    %214 = vmatpush1.xpose.msra.mxu0 %v181
    %215 = vmatprep.subr.mxu0 0.0
    %216 = vmatpush2.xpose.msra.mxu0 0.0
    %217 = vmatprep.subr.mxu0 0.0
    %218 = vmatpush2.xpose.msra.mxu0 0.0
    %219 = vmatprep.subr.mxu0 0.0
    %220 = vmatpush2.xpose.msra.mxu0 0.0
    %221 = vmatprep.subr.mxu0 0.0
    %222 = vmatpush2.xpose.msra.mxu0 0.0
    %223 = vmatprep.subr.mxu0 0.0
    %224 = vmatpush2.xpose.msra.mxu0 0.0
    %225 = vmatprep.subr.mxu0 0.0
    %226 = vmatpush2.xpose.msra.mxu0 0.0
    %227 = vmatprep.subr.mxu0 0.0
    %228 = vmatpush2.xpose.msra.mxu0 0.0
    %229 = vmatprep.subr.mxu0 0.0
    %230 = vmatpush2.xpose.msra.mxu0 0.0
    %231 = vmatprep.subr.mxu0 0.0
    %232 = vmatpush2.xpose.msra.mxu0 0.0
    %233 = vmatprep.subr.mxu0 0.0
    %234 = vmatpush2.xpose.msra.mxu0 0.0
    %235 = vmatprep.subr.mxu0 0.0
    %236 = vmatpush2.xpose.msra.mxu0 0.0
    %237 = vmatprep.subr.mxu0 0.0
    %238 = vmatpush2.xpose.msra.mxu0 0.0
    %239 = vmatprep.subr.mxu0 0.0
    %240 = vmatpush2.xpose.msra.mxu0 0.0
    %241 = vmatprep.subr.mxu0 0.0
    %242 = vmatpush2.xpose.msra.mxu0 0.0
    %243 = vmatprep.subr.mxu0 0.0
    %244 = vmatpush2.xpose.msra.mxu0 0.0
    %245 = vmatprep.subr.mxu0 0.0
    %246 = vmatpush2.xpose.msra.mxu0 0.0
    %247 = vmatprep.mubr.f32.mxu0 0.0
    %248 = vmatmul.mubr.f32.gmra.mxu0 %v178
    %v249 = vpop.f32.mrf.mxu0
    %v250 = vadd.f32 0.0, %v249
    %v251 = vpop.f32.mrf.mxu0
    %252 = vdwg.mxu0
    %v253 = vstv %s176
    %v254 = vmul.f32 %v250, %v253
    %vm255 = vcmask 9216
    %256 = vst.msk [vmem:[#allocation7] sm:$0x3] %vm255, %v254
    %257 = vmatprep.subr.mxu0 0.0
    %258 = vmatpush1.xpose.msra.mxu0 0.0
    %259 = vmatprep.subr.mxu0 0.0
    %260 = vmatpush1.xpose.msra.mxu0 0.0
    %261 = vmatprep.subr.mxu0 0.0
    %262 = vmatpush1.xpose.msra.mxu0 0.0
    %263 = vmatprep.subr.mxu0 0.0
    %264 = vmatpush1.xpose.msra.mxu0 0.0
    %265 = vmatprep.subr.mxu0 0.0
    %266 = vmatpush1.xpose.msra.mxu0 0.0
    %267 = vmatprep.subr.mxu0 0.0
    %268 = vmatpush1.xpose.msra.mxu0 0.0
    %269 = vmatprep.subr.mxu0 0.0
    %270 = vmatpush1.xpose.msra.mxu0 0.0
    %271 = vmatprep.subr.mxu0 0.0
    %272 = vmatpush1.xpose.msra.mxu0 0.0
    %273 = vmatprep.subr.mxu0 0.0
    %274 = vmatpush1.xpose.msra.mxu0 0.0
    %275 = vmatprep.subr.mxu0 0.0
    %276 = vmatpush1.xpose.msra.mxu0 0.0
    %277 = vmatprep.subr.mxu0 0.0
    %278 = vmatpush1.xpose.msra.mxu0 0.0
    %279 = vmatprep.subr.mxu0 0.0
    %280 = vmatpush1.xpose.msra.mxu0 0.0
    %281 = vmatprep.subr.mxu0 0.0
    %282 = vmatpush1.xpose.msra.mxu0 0.0
    %283 = vmatprep.subr.mxu0 0.0
    %284 = vmatpush1.xpose.msra.mxu0 0.0
    %285 = vmatprep.subr.mxu0 0.0
    %286 = vmatpush1.xpose.msra.mxu0 0.0
    %287 = vmatprep.subr.mxu0 0.0
    %288 = vmatpush1.xpose.msra.mxu0 %v178
    %289 = vmatprep.subr.mxu0 0.0
    %290 = vmatpush2.xpose.msra.mxu0 0.0
    %291 = vmatprep.subr.mxu0 0.0
    %292 = vmatpush2.xpose.msra.mxu0 0.0
    %293 = vmatprep.subr.mxu0 0.0
    %294 = vmatpush2.xpose.msra.mxu0 0.0
    %295 = vmatprep.subr.mxu0 0.0
    %296 = vmatpush2.xpose.msra.mxu0 0.0
    %297 = vmatprep.subr.mxu0 0.0
    %298 = vmatpush2.xpose.msra.mxu0 0.0
    %299 = vmatprep.subr.mxu0 0.0
    %300 = vmatpush2.xpose.msra.mxu0 0.0
    %301 = vmatprep.subr.mxu0 0.0
    %302 = vmatpush2.xpose.msra.mxu0 0.0
    %303 = vmatprep.subr.mxu0 0.0
    %304 = vmatpush2.xpose.msra.mxu0 0.0
    %305 = vmatprep.subr.mxu0 0.0
    %306 = vmatpush2.xpose.msra.mxu0 0.0
    %307 = vmatprep.subr.mxu0 0.0
    %308 = vmatpush2.xpose.msra.mxu0 0.0
    %309 = vmatprep.subr.mxu0 0.0
    %310 = vmatpush2.xpose.msra.mxu0 0.0
    %311 = vmatprep.subr.mxu0 0.0
    %312 = vmatpush2.xpose.msra.mxu0 0.0
    %313 = vmatprep.subr.mxu0 0.0
    %314 = vmatpush2.xpose.msra.mxu0 0.0
    %315 = vmatprep.subr.mxu0 0.0
    %316 = vmatpush2.xpose.msra.mxu0 0.0
    %317 = vmatprep.subr.mxu0 0.0
    %318 = vmatpush2.xpose.msra.mxu0 0.0
    %319 = vmatprep.subr.mxu0 0.0
    %320 = vmatpush2.xpose.msra.mxu0 0.0
    %321 = vmatprep.mubr.f32.mxu0 0.0
    %322 = vmatmul.mubr.f32.gmra.mxu0 %v181
    %v323 = vpop.f32.mrf.mxu0
    %v324 = vadd.f32 0.0, %v323
    %v325 = vpop.f32.mrf.mxu0
    %326 = vdwg.mxu0
    %v327 = vmul.f32 %v324, %v253
    %328 = vst.msk [vmem:[#allocation8] sm:$0x3] %vm255, %v327
    // Predicated region
    $region22: #{tpu_custom_call.1} parent=1 // pred_check
      _
    $region23: #{tpu_custom_call.1} parent=1 // pred_check_branch
      %330 = sbr.rel (0) target = $region25
    $region24: #{tpu_custom_call.1} parent=1 // pred_region
      %s332 = ssub.s32 32, 32
      %333 = vsyncadd [#allocation4], %s332
      %s335 = sshll.u32 [#allocation3], 4
      %s336 = int_to_ptr.vmem [resolvable:$true] %s335
      %338 = dma.vmem_to_hbm [thread:$0]  %s336, 32, %s5, [#allocation4]
    $region25: #{tpu_custom_call.1} parent=1 // pred_fallthru
      _
    // Predicated region
    $region26: #{tpu_custom_call.1} parent=1 // pred_check
      _
    $region27: #{tpu_custom_call.1} parent=1 // pred_check_branch
      %340 = sbr.rel (0) target = $region29
    $region28: #{tpu_custom_call.1} parent=1 // pred_region
      %s342 = ssub.s32 32, 32
      %343 = vsyncadd [#allocation6], %s342
      %s345 = sshll.u32 [#allocation5], 4
      %s346 = int_to_ptr.vmem [resolvable:$true] %s345
      %348 = dma.vmem_to_hbm [thread:$0]  %s346, 32, %s6, [#allocation6]
    $region29: #{tpu_custom_call.1} parent=1 // pred_fallthru
      _
    // Predicated region
    $region30: #{tpu_custom_call.1} parent=1 // pred_check
      _
    $region31: #{tpu_custom_call.1} parent=1 // pred_check_branch
      %350 = sbr.rel (0) target = $region33
    $region32: #{tpu_custom_call.1} parent=1 // pred_region
      %s352 = ssub.s32 32, 32
      %353 = vsyncadd [#allocation6], %s352
      %s355 = sshll.u32 [#allocation7], 4
      %s356 = int_to_ptr.vmem [resolvable:$true] %s355
      %358 = dma.vmem_to_hbm [thread:$0]  %s356, 32, %s7, [#allocation6]
    $region33: #{tpu_custom_call.1} parent=1 // pred_fallthru
      _
    // Predicated region
    $region34: #{tpu_custom_call.1} parent=1 // pred_check
      _
    $region35: #{tpu_custom_call.1} parent=1 // pred_check_branch
      %360 = sbr.rel (0) target = $region37
    $region36: #{tpu_custom_call.1} parent=1 // pred_region
      %s362 = ssub.s32 32, 32
      %363 = vsyncadd [#allocation9], %s362
      %s365 = sshll.u32 [#allocation8], 4
      %s366 = int_to_ptr.vmem [resolvable:$true] %s365
      %368 = dma.vmem_to_hbm [thread:$0]  %s366, 32, %s8, [#allocation9]
    $region37: #{tpu_custom_call.1} parent=1 // pred_fallthru
      _
    // Predicated region
    $region38: #{tpu_custom_call.1} parent=1 // pred_check
      _
    $region39: #{tpu_custom_call.1} parent=1 // pred_check_branch
      %370 = sbr.rel (0) target = $region41
    $region40: #{tpu_custom_call.1} parent=1 // pred_region
      %371 = dma.done [#allocation4], 32
    $region41: #{tpu_custom_call.1} parent=1 // pred_fallthru
      _
    // Predicated region
    $region42: #{tpu_custom_call.1} parent=1 // pred_check
      _
    $region43: #{tpu_custom_call.1} parent=1 // pred_check_branch
      %373 = sbr.rel (0) target = $region45
    $region44: #{tpu_custom_call.1} parent=1 // pred_region
      %374 = dma.done [#allocation6], 32
    $region45: #{tpu_custom_call.1} parent=1 // pred_fallthru
      _
    // Predicated region
    $region46: #{tpu_custom_call.1} parent=1 // pred_check
      _
    $region47: #{tpu_custom_call.1} parent=1 // pred_check_branch
      %376 = sbr.rel (0) target = $region49
    $region48: #{tpu_custom_call.1} parent=1 // pred_region
      %377 = dma.done [#allocation6], 32
    $region49: #{tpu_custom_call.1} parent=1 // pred_fallthru
      _
    // Predicated region
    $region50: #{tpu_custom_call.1} parent=1 // pred_check
      _
    $region51: #{tpu_custom_call.1} parent=1 // pred_check_branch
      %379 = sbr.rel (0) target = $region53
    $region52: #{tpu_custom_call.1} parent=1 // pred_region
      %380 = dma.done [#allocation9], 32
    $region53: #{tpu_custom_call.1} parent=1 // pred_fallthru
      _
    %381 = vsyncpa [#allocation4], 1
    %382 = vsyncpa [#allocation6], 1
    %383 = vsyncpa [#allocation9], 1

</llo_original>
